<compile_context>
chip_gen: v7x
topology: tpu7x:2x2x1
jax: 0.10.0
libtpu: 0.0.40
codegen_flags: <defaults>
</compile_context>

<pallas_src>
import functools

import jax
import jax.numpy as jnp
from jax.experimental import pallas as pl
from jax.experimental.pallas import tpu as pltpu

LANE = 128  # TPU lane width; all packed operands are padded to 128 lanes.


# -----------------------------------------------------------------------------
# Kernel
# -----------------------------------------------------------------------------
def _make_kernel(*, num_mlp_layers, L, B_pad, hidden, emb_dim, merge_strategy):
    n = num_mlp_layers
    idx_w_ih = 2 * n
    idx_w_hh = 2 * n + 1
    idx_w_f = 2 * n + 2
    idx_b_rnn = 2 * n
    idx_b_f = 2 * n + 1

    def kernel(av_ref, oin_ref, wp_ref, bp_ref, out_ref):
        # Weight block i lives at rows [i*128, (i+1)*128) of the packed slab.
        def W(i, rows=LANE):
            base = i * LANE
            return wp_ref[base:base + rows, :]

        def Bv(i):
            return bp_ref[i:i + 1, :]

        # ---- fused A/V encoder MLP (block-diagonal weights) -----------------
        # lanes: [A | V | 0]  ->  [A_emb | V_emb | 0]
        x = av_ref[...]
        for i in range(n):
            x = jnp.dot(x, W(i), preferred_element_type=jnp.float32) + Bv(i)
            if i < n - 1:
                x = jnp.maximum(x, 0.0)
        av_emb = x                                     # (L*B_pad, 128)

        # ---- output-consumer MLP --------------------------------------------
        y = oin_ref[...]
        for i in range(n):
            y = jnp.dot(y, W(n + i), preferred_element_type=jnp.float32) + Bv(n + i)
            if i < n - 1:
                y = jnp.maximum(y, 0.0)
        o_emb = y                                      # (B_pad, 128); O_emb in lanes [0:hidden]

        # ---- hoisted input->hidden projection for ALL L layers (1 matmul) ---
        # The packed w_ih block writes into lanes [hidden, hidden+emb_dim), so
        # the RNN state occupies a lane range disjoint from O_emb.
        if merge_strategy == "prod":
            merged = av_emb[:, :hidden] * av_emb[:, hidden:2 * hidden]   # A_emb * V_emb
            xg_all = jnp.dot(merged, W(idx_w_ih, rows=hidden),
                             preferred_element_type=jnp.float32)
        else:  # 'cat' / 'sum' are folded into the packed w_ih block layout.
            xg_all = jnp.dot(av_emb, W(idx_w_ih), preferred_element_type=jnp.float32)
        xg_all = xg_all + Bv(idx_b_rnn)                # (b_ih + b_hh) added once

        # ---- RNNCell recurrence: only state @ w_hh is serial ----------------
        # First step skips the h-matmul because the initial hidden state is 0.
        w_hh = W(idx_w_hh)
        state = jnp.tanh(xg_all[0:B_pad, :])
        for l in range(1, L):      # static unroll (fine for small L)
            hg = jnp.dot(state, w_hh, preferred_element_type=jnp.float32)
            state = jnp.tanh(xg_all[l * B_pad:(l + 1) * B_pad, :] + hg)

        # ---- final Linear on cat([O_emb, state]) -----------------------------
        # Lane ranges are disjoint -> concat is a plain add, then ONE matmul.
        z = o_emb + state
        out = jnp.dot(z, W(idx_w_f), preferred_element_type=jnp.float32) + Bv(idx_b_f)
        out_ref[...] = out                             # (B_pad, 128) full-tile store

    return kernel


# -----------------------------------------------------------------------------
# Wrapper-side packing helpers
# -----------------------------------------------------------------------------
def _w_block(w, row_off=0, col_off=0):
    blk = jnp.zeros((LANE, LANE), jnp.float32)
    return blk.at[row_off:row_off + w.shape[0], col_off:col_off + w.shape[1]].set(w)


def _w_block_diag(wa, wv):
    ra, ca = wa.shape
    blk = jnp.zeros((LANE, LANE), jnp.float32)
    blk = blk.at[:ra, :ca].set(wa)
    blk = blk.at[ra:ra + wv.shape[0], ca:ca + wv.shape[1]].set(wv)
    return blk


def _b_row(b, col_off=0):
    v = b.reshape(-1)
    row = jnp.zeros((1, LANE), jnp.float32)
    return row.at[0, col_off:col_off + v.shape[0]].set(v)


# -----------------------------------------------------------------------------
# Wrapper
# -----------------------------------------------------------------------------
def gnn_encoder_forward(A, V, output, params, *, num_mlp_layers, hidden,
                        emb_dim, merge_strategy, out_dim):
    B, L, one, Din = A.shape
    assert one == 1
    Dout_in = output.shape[1]
    assert 2 * Din <= LANE and Dout_in <= LANE
    assert 2 * hidden <= LANE and hidden + emb_dim <= LANE and out_dim <= LANE

    B_pad = ((B + 7) // 8) * 8   # sublane-align each per-layer row slab

    # ---- activations: [A | V] lane-concatenated, one B_pad-row slab per layer
    AV = jnp.concatenate([A[:, :, 0, :], V[:, :, 0, :]], axis=-1)     # (B, L, 2*Din)
    AV = jnp.transpose(AV, (1, 0, 2))                                 # (L, B, 2*Din)
    AV = jnp.pad(AV, ((0, 0), (0, B_pad - B), (0, LANE - 2 * Din)))
    AV_flat = AV.reshape(L * B_pad, LANE)                             # (L*B_pad, 128)
    O_in = jnp.pad(output, ((0, B_pad - B), (0, LANE - Dout_in)))     # (B_pad, 128)

    # ---- pack every weight into one (n_blocks*128, 128) slab, biases into rows
    w_blocks, b_rows = [], []
    for i in range(num_mlp_layers):                                   # fused A/V MLP
        w_blocks.append(_w_block_diag(params["A_mlp"][2 * i], params["V_mlp"][2 * i]))
        b_rows.append(_b_row(jnp.concatenate(
            [params["A_mlp"][2 * i + 1], params["V_mlp"][2 * i + 1]], axis=1)))
    for i in range(num_mlp_layers):                                   # output MLP
        w_blocks.append(_w_block(params["O_mlp"][2 * i]))
        b_rows.append(_b_row(params["O_mlp"][2 * i + 1]))

    if merge_strategy == "sum":
        # cat([a,v]) @ vstack([w,w]) == (a+v) @ w  -> same hoisted matmul as 'cat'
        w_ih_eff = jnp.concatenate([params["w_ih"], params["w_ih"]], axis=0)
    else:                         # 'cat' -> (2H, E);  'prod' -> (H, E)
        w_ih_eff = params["w_ih"]
    # Place RNN outputs in lanes [hidden, hidden+emb_dim) (disjoint from O_emb).
    w_blocks.append(_w_block(w_ih_eff, col_off=hidden))
    w_blocks.append(_w_block(params["w_hh"], row_off=hidden, col_off=hidden))
    w_blocks.append(_w_block(params["w_f"]))          # rows match [O_emb | state]
    b_rows.append(_b_row(params["b_ih"] + params["b_hh"], col_off=hidden))
    b_rows.append(_b_row(params["b_f"]))

    W_pack = jnp.concatenate(w_blocks, axis=0)        # (n_blocks*128, 128)
    B_pack = jnp.concatenate(b_rows, axis=0)          # (n_bias, 128)

    kernel = _make_kernel(num_mlp_layers=num_mlp_layers, L=L, B_pad=B_pad,
                          hidden=hidden, emb_dim=emb_dim,
                          merge_strategy=merge_strategy)

    n_rows_mm = (num_mlp_layers * (L * B_pad + B_pad)   # MLP chains
                 + L * B_pad                            # hoisted w_ih
                 + (L - 1) * B_pad                      # recurrence
                 + B_pad)                               # final linear
    cost = pl.CostEstimate(
        flops=2 * LANE * LANE * n_rows_mm,
        transcendentals=L * B_pad * LANE,
        bytes_accessed=4 * (AV_flat.size + O_in.size + W_pack.size
                            + B_pack.size + B_pad * LANE))

    out_full = pl.pallas_call(
        kernel,
        out_shape=jax.ShapeDtypeStruct((B_pad, LANE), jnp.float32),
        in_specs=[pl.BlockSpec(memory_space=pltpu.MemorySpace.VMEM)] * 4,
        out_specs=pl.BlockSpec(memory_space=pltpu.MemorySpace.VMEM),
        cost_estimate=cost,
    )(AV_flat, O_in, W_pack, B_pack)
    return out_full[:B, :out_dim]


# -----------------------------------------------------------------------------
# Pure-JAX reference (mirrors the torch module semantics)
# -----------------------------------------------------------------------------
def reference_forward(A, V, output, params, *, hidden, emb_dim, merge_strategy):
    def mlp(x, ps):
        nl = len(ps) // 2
        for i in range(nl):
            x = x @ ps[2 * i] + ps[2 * i + 1]
            if i < nl - 1:
                x = jnp.maximum(x, 0.0)
        return x

    B, L = A.shape[0], A.shape[1]
    A_emb = mlp(A[:, :, 0, :], params["A_mlp"])     # (B, L, H)
    V_emb = mlp(V[:, :, 0, :], params["V_mlp"])
    O_emb = mlp(output, params["O_mlp"])            # (B, H)

    state = jnp.zeros((B, emb_dim), jnp.float32)
    for l in range(L):
        a_l, v_l = A_emb[:, l, :], V_emb[:, l, :]
        if merge_strategy == "cat":
            m = jnp.concatenate([a_l, v_l], axis=1)
        elif merge_strategy == "sum":
            m = a_l + v_l
        else:
            m = a_l * v_l
        state = jnp.tanh(m @ params["w_ih"] + params["b_ih"]
                         + state @ params["w_hh"] + params["b_hh"])
    final = jnp.concatenate([O_emb, state], axis=1)
    return final @ params["w_f"] + params["b_f"]


# -----------------------------------------------------------------------------
# Main
# -----------------------------------------------------------------------------
if __name__ == "__main__":
    B = 4                      # batch
    L = 3                      # number of GNN layers consumed by the RNN
    layer_input_dim = 16
    output_input_dim = 24
    encoder_num_layers = 2     # MLP depth
    hidden = 32                # encoder_hidden_dim
    emb_dim = 16               # layer_embedding_dim
    output_dim = 8

    key = jax.random.PRNGKey(0)

    def init_linear(key, din, dout, scale=0.1):
        kw, kb = jax.random.split(key)
        return (scale * jax.random.normal(kw, (din, dout), jnp.float32),
                scale * jax.random.normal(kb, (1, dout), jnp.float32))

    def init_mlp(key, din, dh, dout, nl):
        ps, dims = [], [din] + [dh] * (nl - 1) + [dout]
        for i in range(nl):
            key, sub = jax.random.split(key)
            w, b = init_linear(sub, dims[i], dims[i + 1])
            ps += [w, b]
        return key, ps

    key, ka, kv, ko = jax.random.split(key, 4)
    A = jax.random.normal(ka, (B, L, 1, layer_input_dim), jnp.float32)
    V = jax.random.normal(kv, (B, L, 1, layer_input_dim), jnp.float32)
    output = jax.random.normal(ko, (B, output_input_dim), jnp.float32)

    for merge_strategy in ("cat", "sum", "prod"):
        merge_dim = 2 * hidden if merge_strategy == "cat" else hidden

        key, A_mlp = init_mlp(key, layer_input_dim, hidden, hidden, encoder_num_layers)
        key, V_mlp = init_mlp(key, layer_input_dim, hidden, hidden, encoder_num_layers)
        key, O_mlp = init_mlp(key, output_input_dim, hidden, hidden, encoder_num_layers)
        key, k1 = jax.random.split(key)
        w_ih, b_ih = init_linear(k1, merge_dim, emb_dim)
        key, k2 = jax.random.split(key)
        w_hh, b_hh = init_linear(k2, emb_dim, emb_dim)
        key, k3 = jax.random.split(key)
        w_f, b_f = init_linear(k3, hidden + emb_dim, output_dim)

        params = dict(A_mlp=A_mlp, V_mlp=V_mlp, O_mlp=O_mlp,
                      w_ih=w_ih, w_hh=w_hh, b_ih=b_ih, b_hh=b_hh,
                      w_f=w_f, b_f=b_f)

        fwd = functools.partial(
            gnn_encoder_forward,
            num_mlp_layers=encoder_num_layers, hidden=hidden, emb_dim=emb_dim,
            merge_strategy=merge_strategy, out_dim=output_dim)

        out = jax.block_until_ready(jax.jit(fwd)(A, V, output, params))
        ref = reference_forward(A, V, output, params, hidden=hidden,
                                emb_dim=emb_dim, merge_strategy=merge_strategy)
        assert out.shape == (B, output_dim)
        assert jnp.allclose(out, ref, rtol=1e-3, atol=1e-3), (merge_strategy, out, ref)

    # TODO(synk): MLP source class was not provided; assumed Linear+ReLU stack
    # without batch norm (use_batch_norm path not reproduced).
    print("KERNEL_OK")
</pallas_src>

<mosaic_0001>
module attributes {stable_mosaic.version = 11 : i64} {
  func.func @kernel(%arg0: memref<24x128xf32, #tpu.memory_space<vmem>>, %arg1: memref<8x128xf32, #tpu.memory_space<vmem>>, %arg2: memref<896x128xf32, #tpu.memory_space<vmem>>, %arg3: memref<6x128xf32, #tpu.memory_space<vmem>>, %arg4: memref<8x128xf32, #tpu.memory_space<vmem>>) attributes {dimension_semantics = [], scalar_prefetch = 0 : i64, scratch_operands = 0 : i64, tpu.core_type = #tpu.core_type<tc>} {
    %c0 = arith.constant 0 : index
    %c0_0 = arith.constant 0 : index
    %0 = vector.load %arg0[%c0, %c0_0] : memref<24x128xf32, #tpu.memory_space<vmem>>, vector<24x128xf32>
    %c0_1 = arith.constant 0 : index
    %c0_2 = arith.constant 0 : index
    %1 = vector.load %arg2[%c0_1, %c0_2] : memref<896x128xf32, #tpu.memory_space<vmem>>, vector<128x128xf32>
    %cst = arith.constant dense<0.000000e+00> : vector<24x128xf32>
    %2 = tpu.matmul %0, %1, %cst {dimension_numbers = #tpu.dot_dimension_numbers<[1], [0], [0], [1], [0, 0, 1, 1], [], []>} : vector<24x128xf32>, vector<128x128xf32>, vector<24x128xf32> -> vector<24x128xf32>
    %c0_3 = arith.constant 0 : index
    %c0_4 = arith.constant 0 : index
    %3 = vector.load %arg3[%c0_3, %c0_4] : memref<6x128xf32, #tpu.memory_space<vmem>>, vector<1x128xf32>
    %4 = vector.broadcast %3 : vector<1x128xf32> to vector<24x128xf32>
    %5 = arith.addf %2, %4 : vector<24x128xf32>
    %cst_5 = arith.constant 0.000000e+00 : f32
    %6 = vector.broadcast %cst_5 : f32 to vector<24x128xf32>
    %7 = arith.maximumf %5, %6 : vector<24x128xf32>
    %c128 = arith.constant 128 : index
    %c0_6 = arith.constant 0 : index
    %8 = vector.load %arg2[%c128, %c0_6] : memref<896x128xf32, #tpu.memory_space<vmem>>, vector<128x128xf32>
    %cst_7 = arith.constant dense<0.000000e+00> : vector<24x128xf32>
    %9 = tpu.matmul %7, %8, %cst_7 {dimension_numbers = #tpu.dot_dimension_numbers<[1], [0], [0], [1], [0, 0, 1, 1], [], []>} : vector<24x128xf32>, vector<128x128xf32>, vector<24x128xf32> -> vector<24x128xf32>
    %c1 = arith.constant 1 : index
    %c0_8 = arith.constant 0 : index
    %10 = vector.load %arg3[%c1, %c0_8] : memref<6x128xf32, #tpu.memory_space<vmem>>, vector<1x128xf32>
    %11 = vector.broadcast %10 : vector<1x128xf32> to vector<24x128xf32>
    %12 = arith.addf %9, %11 : vector<24x128xf32>
    %c0_9 = arith.constant 0 : index
    %c0_10 = arith.constant 0 : index
    %13 = vector.load %arg1[%c0_9, %c0_10] : memref<8x128xf32, #tpu.memory_space<vmem>>, vector<8x128xf32>
    %c256 = arith.constant 256 : index
    %c0_11 = arith.constant 0 : index
    %14 = vector.load %arg2[%c256, %c0_11] : memref<896x128xf32, #tpu.memory_space<vmem>>, vector<128x128xf32>
    %cst_12 = arith.constant dense<0.000000e+00> : vector<8x128xf32>
    %15 = tpu.matmul %13, %14, %cst_12 {dimension_numbers = #tpu.dot_dimension_numbers<[1], [0], [0], [1], [0, 0, 1, 1], [], []>} : vector<8x128xf32>, vector<128x128xf32>, vector<8x128xf32> -> vector<8x128xf32>
    %c2 = arith.constant 2 : index
    %c0_13 = arith.constant 0 : index
    %16 = vector.load %arg3[%c2, %c0_13] : memref<6x128xf32, #tpu.memory_space<vmem>>, vector<1x128xf32>
    %17 = vector.broadcast %16 : vector<1x128xf32> to vector<8x128xf32>
    %18 = arith.addf %15, %17 : vector<8x128xf32>
    %cst_14 = arith.constant 0.000000e+00 : f32
    %19 = vector.broadcast %cst_14 : f32 to vector<8x128xf32>
    %20 = arith.maximumf %18, %19 : vector<8x128xf32>
    %c384 = arith.constant 384 : index
    %c0_15 = arith.constant 0 : index
    %21 = vector.load %arg2[%c384, %c0_15] : memref<896x128xf32, #tpu.memory_space<vmem>>, vector<128x128xf32>
    %cst_16 = arith.constant dense<0.000000e+00> : vector<8x128xf32>
    %22 = tpu.matmul %20, %21, %cst_16 {dimension_numbers = #tpu.dot_dimension_numbers<[1], [0], [0], [1], [0, 0, 1, 1], [], []>} : vector<8x128xf32>, vector<128x128xf32>, vector<8x128xf32> -> vector<8x128xf32>
    %c3 = arith.constant 3 : index
    %c0_17 = arith.constant 0 : index
    %23 = vector.load %arg3[%c3, %c0_17] : memref<6x128xf32, #tpu.memory_space<vmem>>, vector<1x128xf32>
    %24 = vector.broadcast %23 : vector<1x128xf32> to vector<8x128xf32>
    %25 = arith.addf %22, %24 : vector<8x128xf32>
    %c512 = arith.constant 512 : index
    %c0_18 = arith.constant 0 : index
    %26 = vector.load %arg2[%c512, %c0_18] : memref<896x128xf32, #tpu.memory_space<vmem>>, vector<128x128xf32>
    %cst_19 = arith.constant dense<0.000000e+00> : vector<24x128xf32>
    %27 = tpu.matmul %12, %26, %cst_19 {dimension_numbers = #tpu.dot_dimension_numbers<[1], [0], [0], [1], [0, 0, 1, 1], [], []>} : vector<24x128xf32>, vector<128x128xf32>, vector<24x128xf32> -> vector<24x128xf32>
    %c4 = arith.constant 4 : index
    %c0_20 = arith.constant 0 : index
    %28 = vector.load %arg3[%c4, %c0_20] : memref<6x128xf32, #tpu.memory_space<vmem>>, vector<1x128xf32>
    %29 = vector.broadcast %28 : vector<1x128xf32> to vector<24x128xf32>
    %30 = arith.addf %27, %29 : vector<24x128xf32>
    %c640 = arith.constant 640 : index
    %c0_21 = arith.constant 0 : index
    %31 = vector.load %arg2[%c640, %c0_21] : memref<896x128xf32, #tpu.memory_space<vmem>>, vector<128x128xf32>
    %32 = vector.extract_strided_slice %30 {offsets = [0, 0], sizes = [8, 128], strides = [1, 1]} : vector<24x128xf32> to vector<8x128xf32>
    %33 = math.tanh %32 : vector<8x128xf32>
    %cst_22 = arith.constant dense<0.000000e+00> : vector<8x128xf32>
    %34 = tpu.matmul %33, %31, %cst_22 {dimension_numbers = #tpu.dot_dimension_numbers<[1], [0], [0], [1], [0, 0, 1, 1], [], []>} : vector<8x128xf32>, vector<128x128xf32>, vector<8x128xf32> -> vector<8x128xf32>
    %35 = vector.extract_strided_slice %30 {offsets = [8, 0], sizes = [8, 128], strides = [1, 1]} : vector<24x128xf32> to vector<8x128xf32>
    %36 = arith.addf %35, %34 : vector<8x128xf32>
    %37 = math.tanh %36 : vector<8x128xf32>
    %cst_23 = arith.constant dense<0.000000e+00> : vector<8x128xf32>
    %38 = tpu.matmul %37, %31, %cst_23 {dimension_numbers = #tpu.dot_dimension_numbers<[1], [0], [0], [1], [0, 0, 1, 1], [], []>} : vector<8x128xf32>, vector<128x128xf32>, vector<8x128xf32> -> vector<8x128xf32>
    %39 = vector.extract_strided_slice %30 {offsets = [16, 0], sizes = [8, 128], strides = [1, 1]} : vector<24x128xf32> to vector<8x128xf32>
    %40 = arith.addf %39, %38 : vector<8x128xf32>
    %41 = math.tanh %40 : vector<8x128xf32>
    %42 = arith.addf %25, %41 : vector<8x128xf32>
    %c768 = arith.constant 768 : index
    %c0_24 = arith.constant 0 : index
    %43 = vector.load %arg2[%c768, %c0_24] : memref<896x128xf32, #tpu.memory_space<vmem>>, vector<128x128xf32>
    %cst_25 = arith.constant dense<0.000000e+00> : vector<8x128xf32>
    %44 = tpu.matmul %42, %43, %cst_25 {dimension_numbers = #tpu.dot_dimension_numbers<[1], [0], [0], [1], [0, 0, 1, 1], [], []>} : vector<8x128xf32>, vector<128x128xf32>, vector<8x128xf32> -> vector<8x128xf32>
    %c5 = arith.constant 5 : index
    %c0_26 = arith.constant 0 : index
    %45 = vector.load %arg3[%c5, %c0_26] : memref<6x128xf32, #tpu.memory_space<vmem>>, vector<1x128xf32>
    %46 = vector.broadcast %45 : vector<1x128xf32> to vector<8x128xf32>
    %47 = arith.addf %44, %46 : vector<8x128xf32>
    %c0_27 = arith.constant 0 : index
    %c0_28 = arith.constant 0 : index
    %48 = vector.load %arg4[%c0_27, %c0_28] : memref<8x128xf32, #tpu.memory_space<vmem>>, vector<8x128xf32>
    tpu.vector_store %arg4[%c0_27, %c0_28], %47 {strides = array<i32>} : memref<8x128xf32, #tpu.memory_space<vmem>>, vector<8x128xf32>,
    return
  }
}

</mosaic_0001>

<llo_original>
// kernel: gnn_encoder_forward.1
$region0: #{gnn_encoder_forward.1}
  #allocation0 [shape = 'u32[]', space=smem, size = 0x4, offset = 0x4, fixed_abs, tag = 'smem constant byte address 0x4 - core index']
  #allocation1 [shape = 'u32[144,128]{1,0:T(1,128)}', space=vmem, size = 0x12000, scoped, tag = 'internal scratch']
  %s0 = inlined_call_operand.vmem [shape: f32[24,128], index: 0, kind: input, shape index: {}]
  %s1 = inlined_call_operand.vmem [shape: f32[8,128], index: 1, kind: input, shape index: {}]
  %s2 = inlined_call_operand.vmem [shape: f32[896,128], index: 2, kind: input, shape index: {}]
  %s3 = inlined_call_operand.vmem [shape: f32[6,128], index: 3, kind: input, shape index: {}]
  %s4 = inlined_call_operand.vmem [shape: f32[8,128], index: 4, kind: output, shape index: {}]
  %s5 = sld [smem:[#allocation0]]
  $region26: #{gnn_encoder_forward.1} parent=0
    _
  %s7 = ssub.s32 1, %s5
  %s8 = scalar_select 0, %s7, %s5
  // Predicated region
  $region2: #{gnn_encoder_forward.1} parent=0 // pred_check
    _
  $region3: #{gnn_encoder_forward.1} parent=0 // pred_check_branch
    %10 = sbr.rel (0) target = $region5
  $region4: #{gnn_encoder_forward.1} parent=0 // pred_region
    _
  $region5: #{gnn_encoder_forward.1} parent=0 // pred_fallthru
    _
  // Predicated region
  $region6: #{gnn_encoder_forward.1} parent=0 // pred_check
    _
  $region7: #{gnn_encoder_forward.1} parent=0 // pred_check_branch
    %12 = sbr.rel (0) target = $region9
  $region8: #{gnn_encoder_forward.1} parent=0 // pred_region
    _
  $region9: #{gnn_encoder_forward.1} parent=0 // pred_fallthru
    _
  // Predicated region
  $region10: #{gnn_encoder_forward.1} parent=0 // pred_check
    _
  $region11: #{gnn_encoder_forward.1} parent=0 // pred_check_branch
    %14 = sbr.rel (0) target = $region13
  $region12: #{gnn_encoder_forward.1} parent=0 // pred_region
    _
  $region13: #{gnn_encoder_forward.1} parent=0 // pred_fallthru
    _
  // Predicated region
  $region14: #{gnn_encoder_forward.1} parent=0 // pred_check
    _
  $region15: #{gnn_encoder_forward.1} parent=0 // pred_check_branch
    %16 = sbr.rel (0) target = $region17
  $region16: #{gnn_encoder_forward.1} parent=0 // pred_region
    _
  $region17: #{gnn_encoder_forward.1} parent=0 // pred_fallthru
    _
  %v17 = vld [vmem:[%s0] sm:$0xff]
  %v18 = vld [vmem:[%s0 + $0x8] sm:$0xff]
  %v19 = vld [vmem:[%s0 + $0x10] sm:$0xff]
  %v20 = vld [vmem:[%s2] sm:$0xff]
  %v21 = vld [vmem:[%s2 + $0x8] sm:$0xff]
  %v22 = vld [vmem:[%s2 + $0x10] sm:$0xff]
  %v23 = vld [vmem:[%s2 + $0x18] sm:$0xff]
  %v24 = vld [vmem:[%s2 + $0x20] sm:$0xff]
  %v25 = vld [vmem:[%s2 + $0x28] sm:$0xff]
  %v26 = vld [vmem:[%s2 + $0x30] sm:$0xff]
  %v27 = vld [vmem:[%s2 + $0x38] sm:$0xff]
  %v28 = vld [vmem:[%s2 + $0x40] sm:$0xff]
  %v29 = vld [vmem:[%s2 + $0x48] sm:$0xff]
  %v30 = vld [vmem:[%s2 + $0x50] sm:$0xff]
  %v31 = vld [vmem:[%s2 + $0x58] sm:$0xff]
  %v32 = vld [vmem:[%s2 + $0x60] sm:$0xff]
  %v33 = vld [vmem:[%s2 + $0x68] sm:$0xff]
  %v34 = vld [vmem:[%s2 + $0x70] sm:$0xff]
  %v35 = vld [vmem:[%s2 + $0x78] sm:$0xff]
  %v36 = vld [vmem:[%s3] sm:$0x1]
  %v37 = vlaneseq
  %v38 = vshrl.u32 %v37, 7
  %v39 = vsub.s32 0, %v38
  %v40 = vrot.slane %v36, %v39
  %41 = vmatprep.subr.mxu0 0.0
  %42 = vmatpush1.msra.mxu0 %v20
  %43 = vmatprep.subr.mxu0 0.0
  %44 = vmatpush1.msra.mxu0 %v21
  %45 = vmatprep.subr.mxu0 0.0
  %46 = vmatpush1.msra.mxu0 %v22
  %47 = vmatprep.subr.mxu0 0.0
  %48 = vmatpush1.msra.mxu0 %v23
  %49 = vmatprep.subr.mxu0 0.0
  %50 = vmatpush1.msra.mxu0 %v24
  %51 = vmatprep.subr.mxu0 0.0
  %52 = vmatpush1.msra.mxu0 %v25
  %53 = vmatprep.subr.mxu0 0.0
  %54 = vmatpush1.msra.mxu0 %v26
  %55 = vmatprep.subr.mxu0 0.0
  %56 = vmatpush1.msra.mxu0 %v27
  %57 = vmatprep.subr.mxu0 0.0
  %58 = vmatpush1.msra.mxu0 %v28
  %59 = vmatprep.subr.mxu0 0.0
  %60 = vmatpush1.msra.mxu0 %v29
  %61 = vmatprep.subr.mxu0 0.0
  %62 = vmatpush1.msra.mxu0 %v30
  %63 = vmatprep.subr.mxu0 0.0
  %64 = vmatpush1.msra.mxu0 %v31
  %65 = vmatprep.subr.mxu0 0.0
  %66 = vmatpush1.msra.mxu0 %v32
  %67 = vmatprep.subr.mxu0 0.0
  %68 = vmatpush1.msra.mxu0 %v33
  %69 = vmatprep.subr.mxu0 0.0
  %70 = vmatpush1.msra.mxu0 %v34
  %71 = vmatprep.subr.mxu0 0.0
  %72 = vmatpush1.msra.mxu0 %v35
  %73 = vmatprep.subr.mxu0 0.0
  %74 = vmatpush1.msra.mxu0 0.0
  %75 = vmatprep.subr.mxu0 0.0
  %76 = vmatpush1.msra.mxu0 0.0
  %77 = vmatprep.subr.mxu0 0.0
  %78 = vmatpush1.msra.mxu0 0.0
  %79 = vmatprep.subr.mxu0 0.0
  %80 = vmatpush1.msra.mxu0 0.0
  %81 = vmatprep.subr.mxu0 0.0
  %82 = vmatpush1.msra.mxu0 0.0
  %83 = vmatprep.subr.mxu0 0.0
  %84 = vmatpush1.msra.mxu0 0.0
  %85 = vmatprep.subr.mxu0 0.0
  %86 = vmatpush1.msra.mxu0 0.0
  %87 = vmatprep.subr.mxu0 0.0
  %88 = vmatpush1.msra.mxu0 0.0
  %89 = vmatprep.subr.mxu0 0.0
  %90 = vmatpush1.msra.mxu0 0.0
  %91 = vmatprep.subr.mxu0 0.0
  %92 = vmatpush1.msra.mxu0 0.0
  %93 = vmatprep.subr.mxu0 0.0
  %94 = vmatpush1.msra.mxu0 0.0
  %95 = vmatprep.subr.mxu0 0.0
  %96 = vmatpush1.msra.mxu0 0.0
  %97 = vmatprep.subr.mxu0 0.0
  %98 = vmatpush1.msra.mxu0 0.0
  %99 = vmatprep.subr.mxu0 0.0
  %100 = vmatpush1.msra.mxu0 0.0
  %101 = vmatprep.subr.mxu0 0.0
  %102 = vmatpush1.msra.mxu0 0.0
  %103 = vmatprep.subr.mxu0 0.0
  %104 = vmatpush1.msra.mxu0 0.0
  %105 = vmatprep.mubr.f32.mxu0 0.0
  %106 = vmatmul.mubr.f32.gmra.mrb[0].mxu0 %v17
  %v107 = vpop.f32.mrb[0].mxu0
  %v108 = vadd.f32 %v40, %v107
  %v109 = vpop.f32.mrb[0].mxu0
  %110 = vmatprep.mubr.f32.mxu0 0.0
  %111 = vmatmul.mubr.f32.gmra.mrb[0].mxu0 %v18
  %v112 = vpop.f32.mrb[0].mxu0
  %v113 = vadd.f32 %v40, %v112
  %v114 = vpop.f32.mrb[0].mxu0
  %115 = vmatprep.mubr.f32.mxu0 0.0
  %116 = vmatmul.mubr.f32.gmra.mrb[0].mxu0 %v19
  %v117 = vpop.f32.mrb[0].mxu0
  %v118 = vadd.f32 %v40, %v117
  %v119 = vpop.f32.mrb[0].mxu0
  %120 = vdwg.mxu0
  %v121 = vmax.f32 %v108, 0.0
  %v122 = vmax.f32 %v113, 0.0
  %v123 = vmax.f32 %v118, 0.0
  %v124 = vld [vmem:[%s2 + $0x80] sm:$0xff]
  %v125 = vld [vmem:[%s2 + $0x88] sm:$0xff]
  %v126 = vld [vmem:[%s2 + $0x90] sm:$0xff]
  %v127 = vld [vmem:[%s2 + $0x98] sm:$0xff]
  %v128 = vld [vmem:[%s2 + $0xa0] sm:$0xff]
  %v129 = vld [vmem:[%s2 + $0xa8] sm:$0xff]
  %v130 = vld [vmem:[%s2 + $0xb0] sm:$0xff]
  %v131 = vld [vmem:[%s2 + $0xb8] sm:$0xff]
  %v132 = vld [vmem:[%s2 + $0xc0] sm:$0xff]
  %v133 = vld [vmem:[%s2 + $0xc8] sm:$0xff]
  %v134 = vld [vmem:[%s2 + $0xd0] sm:$0xff]
  %v135 = vld [vmem:[%s2 + $0xd8] sm:$0xff]
  %v136 = vld [vmem:[%s2 + $0xe0] sm:$0xff]
  %v137 = vld [vmem:[%s2 + $0xe8] sm:$0xff]
  %v138 = vld [vmem:[%s2 + $0xf0] sm:$0xff]
  %v139 = vld [vmem:[%s2 + $0xf8] sm:$0xff]
  %v140 = vld [vmem:[%s3 + $0x1] sm:$0x1]
  %v141 = vlaneseq
  %v142 = vshrl.u32 %v141, 7
  %v143 = vsub.s32 0, %v142
  %v144 = vrot.slane %v140, %v143
  %145 = vmatprep.subr.mxu0 0.0
  %146 = vmatpush1.msra.mxu0 %v124
  %147 = vmatprep.subr.mxu0 0.0
  %148 = vmatpush1.msra.mxu0 %v125
  %149 = vmatprep.subr.mxu0 0.0
  %150 = vmatpush1.msra.mxu0 %v126
  %151 = vmatprep.subr.mxu0 0.0
  %152 = vmatpush1.msra.mxu0 %v127
  %153 = vmatprep.subr.mxu0 0.0
  %154 = vmatpush1.msra.mxu0 %v128
  %155 = vmatprep.subr.mxu0 0.0
  %156 = vmatpush1.msra.mxu0 %v129
  %157 = vmatprep.subr.mxu0 0.0
  %158 = vmatpush1.msra.mxu0 %v130
  %159 = vmatprep.subr.mxu0 0.0
  %160 = vmatpush1.msra.mxu0 %v131
  %161 = vmatprep.subr.mxu0 0.0
  %162 = vmatpush1.msra.mxu0 %v132
  %163 = vmatprep.subr.mxu0 0.0
  %164 = vmatpush1.msra.mxu0 %v133
  %165 = vmatprep.subr.mxu0 0.0
  %166 = vmatpush1.msra.mxu0 %v134
  %167 = vmatprep.subr.mxu0 0.0
  %168 = vmatpush1.msra.mxu0 %v135
  %169 = vmatprep.subr.mxu0 0.0
  %170 = vmatpush1.msra.mxu0 %v136
  %171 = vmatprep.subr.mxu0 0.0
  %172 = vmatpush1.msra.mxu0 %v137
  %173 = vmatprep.subr.mxu0 0.0
  %174 = vmatpush1.msra.mxu0 %v138
  %175 = vmatprep.subr.mxu0 0.0
  %176 = vmatpush1.msra.mxu0 %v139
  %177 = vmatprep.subr.mxu0 0.0
  %178 = vmatpush1.msra.mxu0 0.0
  %179 = vmatprep.subr.mxu0 0.0
  %180 = vmatpush1.msra.mxu0 0.0
  %181 = vmatprep.subr.mxu0 0.0
  %182 = vmatpush1.msra.mxu0 0.0
  %183 = vmatprep.subr.mxu0 0.0
  %184 = vmatpush1.msra.mxu0 0.0
  %185 = vmatprep.subr.mxu0 0.0
  %186 = vmatpush1.msra.mxu0 0.0
  %187 = vmatprep.subr.mxu0 0.0
  %188 = vmatpush1.msra.mxu0 0.0
  %189 = vmatprep.subr.mxu0 0.0
  %190 = vmatpush1.msra.mxu0 0.0
  %191 = vmatprep.subr.mxu0 0.0
  %192 = vmatpush1.msra.mxu0 0.0
  %193 = vmatprep.subr.mxu0 0.0
  %194 = vmatpush1.msra.mxu0 0.0
  %195 = vmatprep.subr.mxu0 0.0
  %196 = vmatpush1.msra.mxu0 0.0
  %197 = vmatprep.subr.mxu0 0.0
  %198 = vmatpush1.msra.mxu0 0.0
  %199 = vmatprep.subr.mxu0 0.0
  %200 = vmatpush1.msra.mxu0 0.0
  %201 = vmatprep.subr.mxu0 0.0
  %202 = vmatpush1.msra.mxu0 0.0
  %203 = vmatprep.subr.mxu0 0.0
  %204 = vmatpush1.msra.mxu0 0.0
  %205 = vmatprep.subr.mxu0 0.0
  %206 = vmatpush1.msra.mxu0 0.0
  %207 = vmatprep.subr.mxu0 0.0
  %208 = vmatpush1.msra.mxu0 0.0
  %209 = vmatprep.mubr.f32.mxu0 0.0
  %210 = vmatmul.mubr.f32.gmra.mrb[0].mxu0 %v121
  %v211 = vpop.f32.mrb[0].mxu0
  %v212 = vadd.f32 %v144, %v211
  %v213 = vpop.f32.mrb[0].mxu0
  %214 = vmatprep.mubr.f32.mxu0 0.0
  %215 = vmatmul.mubr.f32.gmra.mrb[0].mxu0 %v122
  %v216 = vpop.f32.mrb[0].mxu0
  %v217 = vadd.f32 %v144, %v216
  %v218 = vpop.f32.mrb[0].mxu0
  %219 = vmatprep.mubr.f32.mxu0 0.0
  %220 = vmatmul.mubr.f32.gmra.mrb[0].mxu0 %v123
  %v221 = vpop.f32.mrb[0].mxu0
  %v222 = vadd.f32 %v144, %v221
  %v223 = vpop.f32.mrb[0].mxu0
  %224 = vdwg.mxu0
  %v225 = vld [vmem:[%s1] sm:$0xff]
  %v226 = vld [vmem:[%s2 + $0x100] sm:$0xff]
  %v227 = vld [vmem:[%s2 + $0x108] sm:$0xff]
  %v228 = vld [vmem:[%s2 + $0x110] sm:$0xff]
  %v229 = vld [vmem:[%s2 + $0x118] sm:$0xff]
  %v230 = vld [vmem:[%s2 + $0x120] sm:$0xff]
  %v231 = vld [vmem:[%s2 + $0x128] sm:$0xff]
  %v232 = vld [vmem:[%s2 + $0x130] sm:$0xff]
  %v233 = vld [vmem:[%s2 + $0x138] sm:$0xff]
  %v234 = vld [vmem:[%s2 + $0x140] sm:$0xff]
  %v235 = vld [vmem:[%s2 + $0x148] sm:$0xff]
  %v236 = vld [vmem:[%s2 + $0x150] sm:$0xff]
  %v237 = vld [vmem:[%s2 + $0x158] sm:$0xff]
  %v238 = vld [vmem:[%s2 + $0x160] sm:$0xff]
  %v239 = vld [vmem:[%s2 + $0x168] sm:$0xff]
  %v240 = vld [vmem:[%s2 + $0x170] sm:$0xff]
  %v241 = vld [vmem:[%s2 + $0x178] sm:$0xff]
  %v242 = vld [vmem:[%s3 + $0x2] sm:$0x1]
  %v243 = vlaneseq
  %v244 = vshrl.u32 %v243, 7
  %v245 = vsub.s32 0, %v244
  %v246 = vrot.slane %v242, %v245
  %247 = vmatprep.subr.mxu0 0.0
  %248 = vmatpush1.msra.mxu0 %v226
  %249 = vmatprep.subr.mxu0 0.0
  %250 = vmatpush1.msra.mxu0 %v227
  %251 = vmatprep.subr.mxu0 0.0
  %252 = vmatpush1.msra.mxu0 %v228
  %253 = vmatprep.subr.mxu0 0.0
  %254 = vmatpush1.msra.mxu0 %v229
  %255 = vmatprep.subr.mxu0 0.0
  %256 = vmatpush1.msra.mxu0 %v230
  %257 = vmatprep.subr.mxu0 0.0
  %258 = vmatpush1.msra.mxu0 %v231
  %259 = vmatprep.subr.mxu0 0.0
  %260 = vmatpush1.msra.mxu0 %v232
  %261 = vmatprep.subr.mxu0 0.0
  %262 = vmatpush1.msra.mxu0 %v233
  %263 = vmatprep.subr.mxu0 0.0
  %264 = vmatpush1.msra.mxu0 %v234
  %265 = vmatprep.subr.mxu0 0.0
  %266 = vmatpush1.msra.mxu0 %v235
  %267 = vmatprep.subr.mxu0 0.0
  %268 = vmatpush1.msra.mxu0 %v236
  %269 = vmatprep.subr.mxu0 0.0
  %270 = vmatpush1.msra.mxu0 %v237
  %271 = vmatprep.subr.mxu0 0.0
  %272 = vmatpush1.msra.mxu0 %v238
  %273 = vmatprep.subr.mxu0 0.0
  %274 = vmatpush1.msra.mxu0 %v239
  %275 = vmatprep.subr.mxu0 0.0
  %276 = vmatpush1.msra.mxu0 %v240
  %277 = vmatprep.subr.mxu0 0.0
  %278 = vmatpush1.msra.mxu0 %v241
  %279 = vmatprep.subr.mxu0 0.0
  %280 = vmatpush1.msra.mxu0 0.0
  %281 = vmatprep.subr.mxu0 0.0
  %282 = vmatpush1.msra.mxu0 0.0
  %283 = vmatprep.subr.mxu0 0.0
  %284 = vmatpush1.msra.mxu0 0.0
  %285 = vmatprep.subr.mxu0 0.0
  %286 = vmatpush1.msra.mxu0 0.0
  %287 = vmatprep.subr.mxu0 0.0
  %288 = vmatpush1.msra.mxu0 0.0
  %289 = vmatprep.subr.mxu0 0.0
  %290 = vmatpush1.msra.mxu0 0.0
  %291 = vmatprep.subr.mxu0 0.0
  %292 = vmatpush1.msra.mxu0 0.0
  %293 = vmatprep.subr.mxu0 0.0
  %294 = vmatpush1.msra.mxu0 0.0
  %295 = vmatprep.subr.mxu0 0.0
  %296 = vmatpush1.msra.mxu0 0.0
  %297 = vmatprep.subr.mxu0 0.0
  %298 = vmatpush1.msra.mxu0 0.0
  %299 = vmatprep.subr.mxu0 0.0
  %300 = vmatpush1.msra.mxu0 0.0
  %301 = vmatprep.subr.mxu0 0.0
  %302 = vmatpush1.msra.mxu0 0.0
  %303 = vmatprep.subr.mxu0 0.0
  %304 = vmatpush1.msra.mxu0 0.0
  %305 = vmatprep.subr.mxu0 0.0
  %306 = vmatpush1.msra.mxu0 0.0
  %307 = vmatprep.subr.mxu0 0.0
  %308 = vmatpush1.msra.mxu0 0.0
  %309 = vmatprep.subr.mxu0 0.0
  %310 = vmatpush1.msra.mxu0 0.0
  %311 = vmatprep.mubr.f32.mxu0 0.0
  %312 = vmatmul.mubr.f32.gmra.mrb[0].mxu0 %v225
  %v313 = vpop.f32.mrb[0].mxu0
  %v314 = vadd.f32 %v246, %v313
  %v315 = vpop.f32.mrb[0].mxu0
  %316 = vdwg.mxu0
  %v317 = vmax.f32 %v314, 0.0
  %v318 = vld [vmem:[%s2 + $0x180] sm:$0xff]
  %v319 = vld [vmem:[%s2 + $0x188] sm:$0xff]
  %v320 = vld [vmem:[%s2 + $0x190] sm:$0xff]
  %v321 = vld [vmem:[%s2 + $0x198] sm:$0xff]
  %v322 = vld [vmem:[%s2 + $0x1a0] sm:$0xff]
  %v323 = vld [vmem:[%s2 + $0x1a8] sm:$0xff]
  %v324 = vld [vmem:[%s2 + $0x1b0] sm:$0xff]
  %v325 = vld [vmem:[%s2 + $0x1b8] sm:$0xff]
  %v326 = vld [vmem:[%s2 + $0x1c0] sm:$0xff]
  %v327 = vld [vmem:[%s2 + $0x1c8] sm:$0xff]
  %v328 = vld [vmem:[%s2 + $0x1d0] sm:$0xff]
  %v329 = vld [vmem:[%s2 + $0x1d8] sm:$0xff]
  %v330 = vld [vmem:[%s2 + $0x1e0] sm:$0xff]
  %v331 = vld [vmem:[%s2 + $0x1e8] sm:$0xff]
  %v332 = vld [vmem:[%s2 + $0x1f0] sm:$0xff]
  %v333 = vld [vmem:[%s2 + $0x1f8] sm:$0xff]
  %v334 = vld [vmem:[%s3 + $0x3] sm:$0x1]
  %v335 = vlaneseq
  %v336 = vshrl.u32 %v335, 7
  %v337 = vsub.s32 0, %v336
  %v338 = vrot.slane %v334, %v337
  %339 = vmatprep.subr.mxu0 0.0
  %340 = vmatpush1.msra.mxu0 %v318
  %341 = vmatprep.subr.mxu0 0.0
  %342 = vmatpush1.msra.mxu0 %v319
  %343 = vmatprep.subr.mxu0 0.0
  %344 = vmatpush1.msra.mxu0 %v320
  %345 = vmatprep.subr.mxu0 0.0
  %346 = vmatpush1.msra.mxu0 %v321
  %347 = vmatprep.subr.mxu0 0.0
  %348 = vmatpush1.msra.mxu0 %v322
  %349 = vmatprep.subr.mxu0 0.0
  %350 = vmatpush1.msra.mxu0 %v323
  %351 = vmatprep.subr.mxu0 0.0
  %352 = vmatpush1.msra.mxu0 %v324
  %353 = vmatprep.subr.mxu0 0.0
  %354 = vmatpush1.msra.mxu0 %v325
  %355 = vmatprep.subr.mxu0 0.0
  %356 = vmatpush1.msra.mxu0 %v326
  %357 = vmatprep.subr.mxu0 0.0
  %358 = vmatpush1.msra.mxu0 %v327
  %359 = vmatprep.subr.mxu0 0.0
  %360 = vmatpush1.msra.mxu0 %v328
  %361 = vmatprep.subr.mxu0 0.0
  %362 = vmatpush1.msra.mxu0 %v329
  %363 = vmatprep.subr.mxu0 0.0
  %364 = vmatpush1.msra.mxu0 %v330
  %365 = vmatprep.subr.mxu0 0.0
  %366 = vmatpush1.msra.mxu0 %v331
  %367 = vmatprep.subr.mxu0 0.0
  %368 = vmatpush1.msra.mxu0 %v332
  %369 = vmatprep.subr.mxu0 0.0
  %370 = vmatpush1.msra.mxu0 %v333
  %371 = vmatprep.subr.mxu0 0.0
  %372 = vmatpush1.msra.mxu0 0.0
  %373 = vmatprep.subr.mxu0 0.0
  %374 = vmatpush1.msra.mxu0 0.0
  %375 = vmatprep.subr.mxu0 0.0
  %376 = vmatpush1.msra.mxu0 0.0
  %377 = vmatprep.subr.mxu0 0.0
  %378 = vmatpush1.msra.mxu0 0.0
  %379 = vmatprep.subr.mxu0 0.0
  %380 = vmatpush1.msra.mxu0 0.0
  %381 = vmatprep.subr.mxu0 0.0
  %382 = vmatpush1.msra.mxu0 0.0
  %383 = vmatprep.subr.mxu0 0.0
  %384 = vmatpush1.msra.mxu0 0.0
  %385 = vmatprep.subr.mxu0 0.0
  %386 = vmatpush1.msra.mxu0 0.0
  %387 = vmatprep.subr.mxu0 0.0
  %388 = vmatpush1.msra.mxu0 0.0
  %389 = vmatprep.subr.mxu0 0.0
  %390 = vmatpush1.msra.mxu0 0.0
  %391 = vmatprep.subr.mxu0 0.0
  %392 = vmatpush1.msra.mxu0 0.0
  %393 = vmatprep.subr.mxu0 0.0
  %394 = vmatpush1.msra.mxu0 0.0
  %395 = vmatprep.subr.mxu0 0.0
  %396 = vmatpush1.msra.mxu0 0.0
  %397 = vmatprep.subr.mxu0 0.0
  %398 = vmatpush1.msra.mxu0 0.0
  %399 = vmatprep.subr.mxu0 0.0
  %400 = vmatpush1.msra.mxu0 0.0
  %401 = vmatprep.subr.mxu0 0.0
  %402 = vmatpush1.msra.mxu0 0.0
  %403 = vmatprep.mubr.f32.mxu0 0.0
  %404 = vmatmul.mubr.f32.gmra.mrb[0].mxu0 %v317
  %v405 = vpop.f32.mrb[0].mxu0
  %v406 = vadd.f32 %v338, %v405
  %v407 = vpop.f32.mrb[0].mxu0
  %408 = vdwg.mxu0
  %v409 = vld [vmem:[%s2 + $0x200] sm:$0xff]
  %v410 = vld [vmem:[%s2 + $0x208] sm:$0xff]
  %v411 = vld [vmem:[%s2 + $0x210] sm:$0xff]
  %v412 = vld [vmem:[%s2 + $0x218] sm:$0xff]
  %v413 = vld [vmem:[%s2 + $0x220] sm:$0xff]
  %v414 = vld [vmem:[%s2 + $0x228] sm:$0xff]
  %v415 = vld [vmem:[%s2 + $0x230] sm:$0xff]
  %v416 = vld [vmem:[%s2 + $0x238] sm:$0xff]
  %v417 = vld [vmem:[%s2 + $0x240] sm:$0xff]
  %v418 = vld [vmem:[%s2 + $0x248] sm:$0xff]
  %v419 = vld [vmem:[%s2 + $0x250] sm:$0xff]
  %v420 = vld [vmem:[%s2 + $0x258] sm:$0xff]
  %v421 = vld [vmem:[%s2 + $0x260] sm:$0xff]
  %v422 = vld [vmem:[%s2 + $0x268] sm:$0xff]
  %v423 = vld [vmem:[%s2 + $0x270] sm:$0xff]
  %v424 = vld [vmem:[%s2 + $0x278] sm:$0xff]
  %v425 = vld [vmem:[%s3 + $0x4] sm:$0x1]
  %v426 = vlaneseq
  %v427 = vshrl.u32 %v426, 7
  %v428 = vsub.s32 0, %v427
  %v429 = vrot.slane %v425, %v428
  %430 = vmatprep.subr.mxu0 0.0
  %431 = vmatpush1.msra.mxu0 %v409
  %432 = vmatprep.subr.mxu0 0.0
  %433 = vmatpush1.msra.mxu0 %v410
  %434 = vmatprep.subr.mxu0 0.0
  %435 = vmatpush1.msra.mxu0 %v411
  %436 = vmatprep.subr.mxu0 0.0
  %437 = vmatpush1.msra.mxu0 %v412
  %438 = vmatprep.subr.mxu0 0.0
  %439 = vmatpush1.msra.mxu0 %v413
  %440 = vmatprep.subr.mxu0 0.0
  %441 = vmatpush1.msra.mxu0 %v414
  %442 = vmatprep.subr.mxu0 0.0
  %443 = vmatpush1.msra.mxu0 %v415
  %444 = vmatprep.subr.mxu0 0.0
  %445 = vmatpush1.msra.mxu0 %v416
  %446 = vmatprep.subr.mxu0 0.0
  %447 = vmatpush1.msra.mxu0 %v417
  %448 = vmatprep.subr.mxu0 0.0
  %449 = vmatpush1.msra.mxu0 %v418
  %450 = vmatprep.subr.mxu0 0.0
  %451 = vmatpush1.msra.mxu0 %v419
  %452 = vmatprep.subr.mxu0 0.0
  %453 = vmatpush1.msra.mxu0 %v420
  %454 = vmatprep.subr.mxu0 0.0
  %455 = vmatpush1.msra.mxu0 %v421
  %456 = vmatprep.subr.mxu0 0.0
  %457 = vmatpush1.msra.mxu0 %v422
  %458 = vmatprep.subr.mxu0 0.0
  %459 = vmatpush1.msra.mxu0 %v423
  %460 = vmatprep.subr.mxu0 0.0
  %461 = vmatpush1.msra.mxu0 %v424
  %462 = vmatprep.subr.mxu0 0.0
  %463 = vmatpush1.msra.mxu0 0.0
  %464 = vmatprep.subr.mxu0 0.0
  %465 = vmatpush1.msra.mxu0 0.0
  %466 = vmatprep.subr.mxu0 0.0
  %467 = vmatpush1.msra.mxu0 0.0
  %468 = vmatprep.subr.mxu0 0.0
  %469 = vmatpush1.msra.mxu0 0.0
  %470 = vmatprep.subr.mxu0 0.0
  %471 = vmatpush1.msra.mxu0 0.0
  %472 = vmatprep.subr.mxu0 0.0
  %473 = vmatpush1.msra.mxu0 0.0
  %474 = vmatprep.subr.mxu0 0.0
  %475 = vmatpush1.msra.mxu0 0.0
  %476 = vmatprep.subr.mxu0 0.0
  %477 = vmatpush1.msra.mxu0 0.0
  %478 = vmatprep.subr.mxu0 0.0
  %479 = vmatpush1.msra.mxu0 0.0
  %480 = vmatprep.subr.mxu0 0.0
  %481 = vmatpush1.msra.mxu0 0.0
  %482 = vmatprep.subr.mxu0 0.0
  %483 = vmatpush1.msra.mxu0 0.0
  %484 = vmatprep.subr.mxu0 0.0
  %485 = vmatpush1.msra.mxu0 0.0
  %486 = vmatprep.subr.mxu0 0.0
  %487 = vmatpush1.msra.mxu0 0.0
  %488 = vmatprep.subr.mxu0 0.0
  %489 = vmatpush1.msra.mxu0 0.0
  %490 = vmatprep.subr.mxu0 0.0
  %491 = vmatpush1.msra.mxu0 0.0
  %492 = vmatprep.subr.mxu0 0.0
  %493 = vmatpush1.msra.mxu0 0.0
  %494 = vmatprep.mubr.f32.mxu0 0.0
  %495 = vmatmul.mubr.f32.gmra.mrb[0].mxu0 %v212
  %v496 = vpop.f32.mrb[0].mxu0
  %v497 = vadd.f32 %v429, %v496
  %v498 = vpop.f32.mrb[0].mxu0
  %499 = vmatprep.mubr.f32.mxu0 0.0
  %500 = vmatmul.mubr.f32.gmra.mrb[0].mxu0 %v217
  %v501 = vpop.f32.mrb[0].mxu0
  %v502 = vadd.f32 %v429, %v501
  %v503 = vpop.f32.mrb[0].mxu0
  %504 = vmatprep.mubr.f32.mxu0 0.0
  %505 = vmatmul.mubr.f32.gmra.mrb[0].mxu0 %v222
  %v506 = vpop.f32.mrb[0].mxu0
  %v507 = vadd.f32 %v429, %v506
  %v508 = vpop.f32.mrb[0].mxu0
  %509 = vdwg.mxu0
  %v510 = vld [vmem:[%s2 + $0x280] sm:$0xff]
  %v511 = vld [vmem:[%s2 + $0x288] sm:$0xff]
  %v512 = vld [vmem:[%s2 + $0x290] sm:$0xff]
  %v513 = vld [vmem:[%s2 + $0x298] sm:$0xff]
  %v514 = vld [vmem:[%s2 + $0x2a0] sm:$0xff]
  %v515 = vld [vmem:[%s2 + $0x2a8] sm:$0xff]
  %v516 = vld [vmem:[%s2 + $0x2b0] sm:$0xff]
  %v517 = vld [vmem:[%s2 + $0x2b8] sm:$0xff]
  %v518 = vld [vmem:[%s2 + $0x2c0] sm:$0xff]
  %v519 = vld [vmem:[%s2 + $0x2c8] sm:$0xff]
  %v520 = vld [vmem:[%s2 + $0x2d0] sm:$0xff]
  %v521 = vld [vmem:[%s2 + $0x2d8] sm:$0xff]
  %v522 = vld [vmem:[%s2 + $0x2e0] sm:$0xff]
  %v523 = vld [vmem:[%s2 + $0x2e8] sm:$0xff]
  %v524 = vld [vmem:[%s2 + $0x2f0] sm:$0xff]
  %v525 = vld [vmem:[%s2 + $0x2f8] sm:$0xff]
  %v526 = vtanh.pop %v497
  %527 = vmatprep.subr.mxu0 0.0
  %528 = vmatpush1.msra.mxu0 %v510
  %529 = vmatprep.subr.mxu0 0.0
  %530 = vmatpush1.msra.mxu0 %v511
  %531 = vmatprep.subr.mxu0 0.0
  %532 = vmatpush1.msra.mxu0 %v512
  %533 = vmatprep.subr.mxu0 0.0
  %534 = vmatpush1.msra.mxu0 %v513
  %535 = vmatprep.subr.mxu0 0.0
  %536 = vmatpush1.msra.mxu0 %v514
  %537 = vmatprep.subr.mxu0 0.0
  %538 = vmatpush1.msra.mxu0 %v515
  %539 = vmatprep.subr.mxu0 0.0
  %540 = vmatpush1.msra.mxu0 %v516
  %541 = vmatprep.subr.mxu0 0.0
  %542 = vmatpush1.msra.mxu0 %v517
  %543 = vmatprep.subr.mxu0 0.0
  %544 = vmatpush1.msra.mxu0 %v518
  %545 = vmatprep.subr.mxu0 0.0
  %546 = vmatpush1.msra.mxu0 %v519
  %547 = vmatprep.subr.mxu0 0.0
  %548 = vmatpush1.msra.mxu0 %v520
  %549 = vmatprep.subr.mxu0 0.0
  %550 = vmatpush1.msra.mxu0 %v521
  %551 = vmatprep.subr.mxu0 0.0
  %552 = vmatpush1.msra.mxu0 %v522
  %553 = vmatprep.subr.mxu0 0.0
  %554 = vmatpush1.msra.mxu0 %v523
  %555 = vmatprep.subr.mxu0 0.0
  %556 = vmatpush1.msra.mxu0 %v524
  %557 = vmatprep.subr.mxu0 0.0
  %558 = vmatpush1.msra.mxu0 %v525
  %559 = vmatprep.subr.mxu0 0.0
  %560 = vmatpush1.msra.mxu0 0.0
  %561 = vmatprep.subr.mxu0 0.0
  %562 = vmatpush1.msra.mxu0 0.0
  %563 = vmatprep.subr.mxu0 0.0
  %564 = vmatpush1.msra.mxu0 0.0
  %565 = vmatprep.subr.mxu0 0.0
  %566 = vmatpush1.msra.mxu0 0.0
  %567 = vmatprep.subr.mxu0 0.0
  %568 = vmatpush1.msra.mxu0 0.0
  %569 = vmatprep.subr.mxu0 0.0
  %570 = vmatpush1.msra.mxu0 0.0
  %571 = vmatprep.subr.mxu0 0.0
  %572 = vmatpush1.msra.mxu0 0.0
  %573 = vmatprep.subr.mxu0 0.0
  %574 = vmatpush1.msra.mxu0 0.0
  %575 = vmatprep.subr.mxu0 0.0
  %576 = vmatpush1.msra.mxu0 0.0
  %577 = vmatprep.subr.mxu0 0.0
  %578 = vmatpush1.msra.mxu0 0.0
  %579 = vmatprep.subr.mxu0 0.0
  %580 = vmatpush1.msra.mxu0 0.0
  %581 = vmatprep.subr.mxu0 0.0
  %582 = vmatpush1.msra.mxu0 0.0
  %583 = vmatprep.subr.mxu0 0.0
  %584 = vmatpush1.msra.mxu0 0.0
  %585 = vmatprep.subr.mxu0 0.0
  %586 = vmatpush1.msra.mxu0 0.0
  %587 = vmatprep.subr.mxu0 0.0
  %588 = vmatpush1.msra.mxu0 0.0
  %589 = vmatprep.subr.mxu0 0.0
  %590 = vmatpush1.msra.mxu0 0.0
  %591 = vmatprep.mubr.f32.mxu0 0.0
  %592 = vmatmul.mubr.f32.gmra.mrb[0].mxu0 %v526
  %v593 = vpop.f32.mrb[0].mxu0
  %v594 = vadd.f32 0.0, %v593
  %v595 = vpop.f32.mrb[0].mxu0
  %596 = vdwg.mxu0
  %v597 = vadd.f32 %v502, %v594
  %v598 = vtanh.pop %v597
  %599 = vmatprep.subr.mxu0 0.0
  %600 = vmatpush1.msra.mxu0 %v510
  %601 = vmatprep.subr.mxu0 0.0
  %602 = vmatpush1.msra.mxu0 %v511
  %603 = vmatprep.subr.mxu0 0.0
  %604 = vmatpush1.msra.mxu0 %v512
  %605 = vmatprep.subr.mxu0 0.0
  %606 = vmatpush1.msra.mxu0 %v513
  %607 = vmatprep.subr.mxu0 0.0
  %608 = vmatpush1.msra.mxu0 %v514
  %609 = vmatprep.subr.mxu0 0.0
  %610 = vmatpush1.msra.mxu0 %v515
  %611 = vmatprep.subr.mxu0 0.0
  %612 = vmatpush1.msra.mxu0 %v516
  %613 = vmatprep.subr.mxu0 0.0
  %614 = vmatpush1.msra.mxu0 %v517
  %615 = vmatprep.subr.mxu0 0.0
  %616 = vmatpush1.msra.mxu0 %v518
  %617 = vmatprep.subr.mxu0 0.0
  %618 = vmatpush1.msra.mxu0 %v519
  %619 = vmatprep.subr.mxu0 0.0
  %620 = vmatpush1.msra.mxu0 %v520
  %621 = vmatprep.subr.mxu0 0.0
  %622 = vmatpush1.msra.mxu0 %v521
  %623 = vmatprep.subr.mxu0 0.0
  %624 = vmatpush1.msra.mxu0 %v522
  %625 = vmatprep.subr.mxu0 0.0
  %626 = vmatpush1.msra.mxu0 %v523
  %627 = vmatprep.subr.mxu0 0.0
  %628 = vmatpush1.msra.mxu0 %v524
  %629 = vmatprep.subr.mxu0 0.0
  %630 = vmatpush1.msra.mxu0 %v525
  %631 = vmatprep.subr.mxu0 0.0
  %632 = vmatpush1.msra.mxu0 0.0
  %633 = vmatprep.subr.mxu0 0.0
  %634 = vmatpush1.msra.mxu0 0.0
  %635 = vmatprep.subr.mxu0 0.0
  %636 = vmatpush1.msra.mxu0 0.0
  %637 = vmatprep.subr.mxu0 0.0
  %638 = vmatpush1.msra.mxu0 0.0
  %639 = vmatprep.subr.mxu0 0.0
  %640 = vmatpush1.msra.mxu0 0.0
  %641 = vmatprep.subr.mxu0 0.0
  %642 = vmatpush1.msra.mxu0 0.0
  %643 = vmatprep.subr.mxu0 0.0
  %644 = vmatpush1.msra.mxu0 0.0
  %645 = vmatprep.subr.mxu0 0.0
  %646 = vmatpush1.msra.mxu0 0.0
  %647 = vmatprep.subr.mxu0 0.0
  %648 = vmatpush1.msra.mxu0 0.0
  %649 = vmatprep.subr.mxu0 0.0
  %650 = vmatpush1.msra.mxu0 0.0
  %651 = vmatprep.subr.mxu0 0.0
  %652 = vmatpush1.msra.mxu0 0.0
  %653 = vmatprep.subr.mxu0 0.0
  %654 = vmatpush1.msra.mxu0 0.0
  %655 = vmatprep.subr.mxu0 0.0
  %656 = vmatpush1.msra.mxu0 0.0
  %657 = vmatprep.subr.mxu0 0.0
  %658 = vmatpush1.msra.mxu0 0.0
  %659 = vmatprep.subr.mxu0 0.0
  %660 = vmatpush1.msra.mxu0 0.0
  %661 = vmatprep.subr.mxu0 0.0
  %662 = vmatpush1.msra.mxu0 0.0
  %663 = vmatprep.mubr.f32.mxu0 0.0
  %664 = vmatmul.mubr.f32.gmra.mrb[0].mxu0 %v598
  %v665 = vpop.f32.mrb[0].mxu0
  %v666 = vadd.f32 0.0, %v665
  %v667 = vpop.f32.mrb[0].mxu0
  %668 = vdwg.mxu0
  %v669 = vadd.f32 %v507, %v666
  %v670 = vtanh.pop %v669
  %v671 = vadd.f32 %v406, %v670
  %v672 = vld [vmem:[%s2 + $0x300] sm:$0xff]
  %v673 = vld [vmem:[%s2 + $0x308] sm:$0xff]
  %v674 = vld [vmem:[%s2 + $0x310] sm:$0xff]
  %v675 = vld [vmem:[%s2 + $0x318] sm:$0xff]
  %v676 = vld [vmem:[%s2 + $0x320] sm:$0xff]
  %v677 = vld [vmem:[%s2 + $0x328] sm:$0xff]
  %v678 = vld [vmem:[%s2 + $0x330] sm:$0xff]
  %v679 = vld [vmem:[%s2 + $0x338] sm:$0xff]
  %v680 = vld [vmem:[%s2 + $0x340] sm:$0xff]
  %v681 = vld [vmem:[%s2 + $0x348] sm:$0xff]
  %v682 = vld [vmem:[%s2 + $0x350] sm:$0xff]
  %v683 = vld [vmem:[%s2 + $0x358] sm:$0xff]
  %v684 = vld [vmem:[%s2 + $0x360] sm:$0xff]
  %v685 = vld [vmem:[%s2 + $0x368] sm:$0xff]
  %v686 = vld [vmem:[%s2 + $0x370] sm:$0xff]
  %v687 = vld [vmem:[%s2 + $0x378] sm:$0xff]
  %v688 = vld [vmem:[%s3 + $0x5] sm:$0x1]
  %v689 = vlaneseq
  %v690 = vshrl.u32 %v689, 7
  %v691 = vsub.s32 0, %v690
  %v692 = vrot.slane %v688, %v691
  %693 = vmatprep.subr.mxu0 0.0
  %694 = vmatpush1.msra.mxu0 %v672
  %695 = vmatprep.subr.mxu0 0.0
  %696 = vmatpush1.msra.mxu0 %v673
  %697 = vmatprep.subr.mxu0 0.0
  %698 = vmatpush1.msra.mxu0 %v674
  %699 = vmatprep.subr.mxu0 0.0
  %700 = vmatpush1.msra.mxu0 %v675
  %701 = vmatprep.subr.mxu0 0.0
  %702 = vmatpush1.msra.mxu0 %v676
  %703 = vmatprep.subr.mxu0 0.0
  %704 = vmatpush1.msra.mxu0 %v677
  %705 = vmatprep.subr.mxu0 0.0
  %706 = vmatpush1.msra.mxu0 %v678
  %707 = vmatprep.subr.mxu0 0.0
  %708 = vmatpush1.msra.mxu0 %v679
  %709 = vmatprep.subr.mxu0 0.0
  %710 = vmatpush1.msra.mxu0 %v680
  %711 = vmatprep.subr.mxu0 0.0
  %712 = vmatpush1.msra.mxu0 %v681
  %713 = vmatprep.subr.mxu0 0.0
  %714 = vmatpush1.msra.mxu0 %v682
  %715 = vmatprep.subr.mxu0 0.0
  %716 = vmatpush1.msra.mxu0 %v683
  %717 = vmatprep.subr.mxu0 0.0
  %718 = vmatpush1.msra.mxu0 %v684
  %719 = vmatprep.subr.mxu0 0.0
  %720 = vmatpush1.msra.mxu0 %v685
  %721 = vmatprep.subr.mxu0 0.0
  %722 = vmatpush1.msra.mxu0 %v686
  %723 = vmatprep.subr.mxu0 0.0
  %724 = vmatpush1.msra.mxu0 %v687
  %725 = vmatprep.subr.mxu0 0.0
  %726 = vmatpush1.msra.mxu0 0.0
  %727 = vmatprep.subr.mxu0 0.0
  %728 = vmatpush1.msra.mxu0 0.0
  %729 = vmatprep.subr.mxu0 0.0
  %730 = vmatpush1.msra.mxu0 0.0
  %731 = vmatprep.subr.mxu0 0.0
  %732 = vmatpush1.msra.mxu0 0.0
  %733 = vmatprep.subr.mxu0 0.0
  %734 = vmatpush1.msra.mxu0 0.0
  %735 = vmatprep.subr.mxu0 0.0
  %736 = vmatpush1.msra.mxu0 0.0
  %737 = vmatprep.subr.mxu0 0.0
  %738 = vmatpush1.msra.mxu0 0.0
  %739 = vmatprep.subr.mxu0 0.0
  %740 = vmatpush1.msra.mxu0 0.0
  %741 = vmatprep.subr.mxu0 0.0
  %742 = vmatpush1.msra.mxu0 0.0
  %743 = vmatprep.subr.mxu0 0.0
  %744 = vmatpush1.msra.mxu0 0.0
  %745 = vmatprep.subr.mxu0 0.0
  %746 = vmatpush1.msra.mxu0 0.0
  %747 = vmatprep.subr.mxu0 0.0
  %748 = vmatpush1.msra.mxu0 0.0
  %749 = vmatprep.subr.mxu0 0.0
  %750 = vmatpush1.msra.mxu0 0.0
  %751 = vmatprep.subr.mxu0 0.0
  %752 = vmatpush1.msra.mxu0 0.0
  %753 = vmatprep.subr.mxu0 0.0
  %754 = vmatpush1.msra.mxu0 0.0
  %755 = vmatprep.subr.mxu0 0.0
  %756 = vmatpush1.msra.mxu0 0.0
  %757 = vmatprep.mubr.f32.mxu0 0.0
  %758 = vmatmul.mubr.f32.gmra.mrb[0].mxu0 %v671
  %v759 = vpop.f32.mrb[0].mxu0
  %v760 = vadd.f32 %v692, %v759
  %v761 = vpop.f32.mrb[0].mxu0
  %762 = vdwg.mxu0
  %763 = vst [vmem:[%s4] sm:$0xff] %v760
  // Predicated region
  $region18: #{gnn_encoder_forward.1} parent=0 // pred_check
    _
  $region19: #{gnn_encoder_forward.1} parent=0 // pred_check_branch
    %765 = sbr.rel (0) target = $region21
  $region20: #{gnn_encoder_forward.1} parent=0 // pred_region
    _
  $region21: #{gnn_encoder_forward.1} parent=0 // pred_fallthru
    _
  // Predicated region
  $region22: #{gnn_encoder_forward.1} parent=0 // pred_check
    _
  $region23: #{gnn_encoder_forward.1} parent=0 // pred_check_branch
    %767 = sbr.rel (0) target = $region25
  $region24: #{gnn_encoder_forward.1} parent=0 // pred_region
    _
  $region25: #{gnn_encoder_forward.1} parent=0 // pred_fallthru
    _

</llo_original>
